<compile_context>
chip_gen: v6e
topology: v6e:2x2x1
jax: 0.10.0
libtpu: 0.0.40
codegen_flags: <defaults>
</compile_context>

<pallas_src>
import jax
import jax.numpy as jnp
from jax.experimental import pallas as pl
from jax.experimental.pallas import tpu as pltpu

_MIB = 1024 * 1024


def _layer_scaler_kernel(g_ref, x_ref, o_ref):
    # g_ref block: (TR, 1)   -> per-row (per-channel) scale column
    # x_ref block: (TR, TL)  -> lane-dense rows
    o_ref[...] = (x_ref[...] * g_ref[...]).astype(o_ref.dtype)


def _cdiv(a: int, b: int) -> int:
    return -(-a // b)


def _round_up(a: int, m: int) -> int:
    return _cdiv(a, m) * m


def _sublane_multiple(itemsize: int) -> int:
    # vreg sublane packing: f32 -> 8 rows, bf16/f16 -> 16, int8/fp8 -> 32.
    if itemsize >= 4:
        return 8
    if itemsize == 2:
        return 16
    return 32


def _vmem_capacity_bytes() -> int:
    try:
        return int(pltpu.get_tpu_info().vmem_capacity_bytes)
    except Exception:
        return 64 * _MIB  # conservative (v7x-sized) fallback


def _choose_tiles(n_rows: int, n_cols: int, itemsize: int, *,
                  target_bytes: int, sublane: int):
    """Pick (TR, TL): sublane-aligned row tile, lane-dense (x128) column tile."""
    row_bytes = n_cols * itemsize
    min_rows = min(n_rows, sublane)

    # Column tiling only if a minimum-height row block already exceeds the
    # budget (very large H*W); keeps the working set bounded for any shape.
    if min_rows * row_bytes > target_bytes and n_cols > 128:
        tr = n_rows if n_rows < sublane else sublane
        tl = (target_bytes // max(1, tr * itemsize)) // 128 * 128
        tl = max(128, min(tl, n_cols))
        return tr, tl

    # Full-width rows.
    if n_rows <= sublane:
        return n_rows, n_cols
    tr = (target_bytes // max(1, row_bytes)) // sublane * sublane
    tr = max(sublane, tr)
    if tr >= n_rows:
        # Everything fits in one tile: split into two balanced row blocks when
        # there is enough work so the grid can shard across 2 TCs (v7x).
        if n_rows >= 2 * sublane:
            half = _round_up(_cdiv(n_rows, 2), sublane)
            if half < n_rows:
                return half, n_cols
        return n_rows, n_cols
    # Prefer an even number of row steps (balances across v7x's 2 TensorCores).
    steps = _cdiv(n_rows, tr)
    if steps > 1 and steps % 2 == 1:
        steps += 1
        tr = max(sublane, min(tr, _round_up(_cdiv(n_rows, steps), sublane)))
    return tr, n_cols


def layer_scaler(x: jax.Array, gamma: jax.Array) -> jax.Array:
    """x: (N, C, H, W), gamma: (C, 1, 1) -> gamma * x (per-channel scale)."""
    N, C, H, W = x.shape
    assert gamma.shape == (C, 1, 1)

    R = N * C          # one flattened row per (n, c)
    L = H * W          # lane-dense row length

    # Free reshape for contiguous NCHW; row r = n*C + c is one (H, W) plane.
    x2 = x.reshape(R, L)
    # Per-row scale column: row r = n*C + c gets gamma[c]. NOTE: gamma is cast
    # to x's dtype so the multiply stays in input precision; for mixed dtypes
    # (f32 gamma * bf16 x) this deviates slightly from PyTorch's f32 promotion.
    g_col = jnp.broadcast_to(gamma.reshape(1, C), (N, C)).reshape(R, 1).astype(x.dtype)

    itemsize = jnp.dtype(x.dtype).itemsize
    sublane = _sublane_multiple(itemsize)

    vmem_cap = _vmem_capacity_bytes()
    # ~8 MiB tiles on 64-MiB-VMEM chips (v7x), ~16 MiB on 128-MiB chips (v5e/v6e).
    target_tile_bytes = 8 * _MIB if vmem_cap <= 64 * _MIB else 16 * _MIB

    TR, TL = _choose_tiles(R, L, itemsize,
                           target_bytes=target_tile_bytes, sublane=sublane)
    grid = (_cdiv(R, TR), _cdiv(L, TL))

    # Double-buffered x-in + out = 4 tiles, plus gamma column + slack; clamp to
    # 3/4 of physical VMEM so the config is safe on every generation.
    tile_bytes = TR * TL * itemsize
    vmem_limit = 4 * tile_bytes + 8 * _MIB
    vmem_limit = max(16 * _MIB, min(vmem_limit, (3 * vmem_cap) // 4))

    # read x + write out + gamma column (re-read once per column step).
    bytes_accessed = 2 * R * L * itemsize + grid[1] * R * itemsize

    out2 = pl.pallas_call(
        _layer_scaler_kernel,
        out_shape=jax.ShapeDtypeStruct((R, L), x.dtype),
        grid_spec=pltpu.PrefetchScalarGridSpec(
            num_scalar_prefetch=0,
            grid=grid,
            in_specs=[
                # gamma column: block index pinned to (i, 0) -> resident across j.
                pl.BlockSpec((TR, 1), lambda i, j: (i, 0)),
                # x: (TR, TL) lane-dense streaming tile.
                pl.BlockSpec((TR, TL), lambda i, j: (i, j)),
            ],
            out_specs=pl.BlockSpec((TR, TL), lambda i, j: (i, j)),
        ),
        compiler_params=pltpu.CompilerParams(
            dimension_semantics=("parallel", "parallel"),
            vmem_limit_bytes=int(vmem_limit),
        ),
        cost_estimate=pl.CostEstimate(
            flops=R * L,
            transcendentals=0,
            bytes_accessed=int(bytes_accessed),
        ),
    )(g_col, x2)

    return out2.reshape(N, C, H, W)


if __name__ == "__main__":
    # Module config: LayerScaler(init_value=1e-6, dimensions=C)
    init_value = 1e-6
    N, C, H, W = 2, 4, 16, 16

    key = jax.random.PRNGKey(0)
    x = jax.random.normal(key, (N, C, H, W), dtype=jnp.float32)

    # Deterministic parameter init, exactly as in __init__:
    # gamma = ones(C, 1, 1) * init_value
    gamma = jnp.ones((C, 1, 1), dtype=jnp.float32) * init_value

    out = layer_scaler(x, gamma)
    out = jax.block_until_ready(out)

    # Sanity check against the pure-JAX reference (broadcasted multiply).
    ref = gamma[None, :, :, :] * x
    assert out.shape == (N, C, H, W)
    assert jnp.allclose(out, ref, atol=1e-7, rtol=1e-6)

    print("KERNEL_OK")
</pallas_src>

<mosaic_0001>
module attributes {stable_mosaic.version = 11 : i64} {
  func.func @_layer_scaler_kernel(%arg0: i32, %arg1: i32, %arg2: memref<8x1xf32, #tpu.memory_space<vmem>>, %arg3: memref<8x256xf32, #tpu.memory_space<vmem>>, %arg4: memref<8x256xf32, #tpu.memory_space<vmem>>) attributes {dimension_semantics = [#tpu.dimension_semantics<parallel>, #tpu.dimension_semantics<parallel>], iteration_bounds = array<i64: 1, 1>, scalar_prefetch = 0 : i64, scratch_operands = 0 : i64, tpu.core_type = #tpu.core_type<tc>, window_params = [{transform_indices = @transform_0, window_bounds = array<i64: 8, 1>}, {transform_indices = @transform_1, window_bounds = array<i64: 8, 256>}, {transform_indices = @transform_2, window_bounds = array<i64: 8, 256>}]} {
    %c0 = arith.constant 0 : index
    %c0_0 = arith.constant 0 : index
    %0 = vector.load %arg3[%c0, %c0_0] : memref<8x256xf32, #tpu.memory_space<vmem>>, vector<8x256xf32>
    %c0_1 = arith.constant 0 : index
    %c0_2 = arith.constant 0 : index
    %1 = vector.load %arg2[%c0_1, %c0_2] : memref<8x1xf32, #tpu.memory_space<vmem>>, vector<8x1xf32>
    %2 = vector.broadcast %1 : vector<8x1xf32> to vector<8x256xf32>
    %3 = arith.mulf %0, %2 : vector<8x256xf32>
    %c0_3 = arith.constant 0 : index
    %c0_4 = arith.constant 0 : index
    %4 = vector.load %arg4[%c0_3, %c0_4] : memref<8x256xf32, #tpu.memory_space<vmem>>, vector<8x256xf32>
    tpu.vector_store %arg4[%c0_3, %c0_4], %3 {strides = array<i32>} : memref<8x256xf32, #tpu.memory_space<vmem>>, vector<8x256xf32>,
    return
  }
  func.func @transform_0(%arg0: i32, %arg1: i32) -> (i32, i32) {
    %c0_i32 = arith.constant 0 : i32
    %c0_i32_0 = arith.constant 0 : i32
    return %arg0, %c0_i32 : i32, i32
  }
  func.func @transform_1(%arg0: i32, %arg1: i32) -> (i32, i32) {
    %c0_i32 = arith.constant 0 : i32
    return %arg0, %arg1 : i32, i32
  }
  func.func @transform_2(%arg0: i32, %arg1: i32) -> (i32, i32) {
    %c0_i32 = arith.constant 0 : i32
    return %arg0, %arg1 : i32, i32
  }
}

</mosaic_0001>

<llo_original>
// kernel: tpu_custom_call.1
$region0: #{tpu_custom_call.1}
  #allocation0 [shape = 'u32[]', space=smem, size = 0x4, offset = 0x4, fixed_abs, tag = 'smem constant byte address 0x4 - core index']
  #allocation1 [shape = 'u32[144,128]{1,0:T(1,128)}', space=vmem, size = 0x12000, scoped, tag = 'internal scratch']
  %s0 = inlined_call_operand.vmem [shape: f32[8,1], index: 0, kind: input, shape index: {}]
  %s1 = inlined_call_operand.hbm [shape: f32[8,256], index: 1, kind: input, shape index: {}]
  %s2 = inlined_call_operand.hbm [shape: f32[8,256], index: 2, kind: output, shape index: {}]
  %s3 = sld [smem:[#allocation0]]
  $region22: #{tpu_custom_call.1} parent=0
    _
  %s5 = ssub.s32 1, %s3
  %s6 = scalar_select 0, %s5, %s3
  $region1: #{tpu_custom_call.1} parent=0
    #allocation2 [shape = 'u8[8192]{0}', space=vmem, size = 0x2000, scoped, tag = 'input window, operand 1, single buffered']
    #allocation3 [shape = 's32[1]{0}', space=sflag, size = 0x4, scoped, tag = 'scoped memory for tpu_custom_call.1']
    #allocation4 [shape = 's32[1]{0}', space=sflag, size = 0x4, scoped, tag = 'scoped memory for tpu_custom_call.1']
    #allocation5 [shape = 'u8[8192]{0}', space=vmem, size = 0x2000, scoped, tag = 'output window, operand 0, single buffered']
    %7 = vsyncpa [#allocation3], 0
    %8 = vsyncpa [#allocation4], 0
    // Predicated region
    $region2: #{tpu_custom_call.1} parent=1 // pred_check
      _
    $region3: #{tpu_custom_call.1} parent=1 // pred_check_branch
      %10 = sbr.rel (0) target = $region5
    $region4: #{tpu_custom_call.1} parent=1 // pred_region
      _
    $region5: #{tpu_custom_call.1} parent=1 // pred_fallthru
      _
    // Predicated region
    $region6: #{tpu_custom_call.1} parent=1 // pred_check
      _
    $region7: #{tpu_custom_call.1} parent=1 // pred_check_branch
      %12 = sbr.rel (0) target = $region9
    $region8: #{tpu_custom_call.1} parent=1 // pred_region
      %s14 = ssub.s32 256, 256
      %15 = vsyncadd [#allocation3], %s14
      %s17 = sshll.u32 [#allocation2], 4
      %s18 = int_to_ptr.vmem [resolvable:$true] %s17
      %20 = dma.hbm_to_vmem [thread:$0]  %s1, 256, %s18, [#allocation3]
    $region9: #{tpu_custom_call.1} parent=1 // pred_fallthru
      _
    // Predicated region
    $region10: #{tpu_custom_call.1} parent=1 // pred_check
      _
    $region11: #{tpu_custom_call.1} parent=1 // pred_check_branch
      %22 = sbr.rel (0) target = $region13
    $region12: #{tpu_custom_call.1} parent=1 // pred_region
      %23 = dma.done [#allocation3], 256
    $region13: #{tpu_custom_call.1} parent=1 // pred_fallthru
      _
    %v24 = vld [vmem:[#allocation2] sm:$0xff]
    %v25 = vld [vmem:[#allocation2 + $0x8] sm:$0xff]
    %v26 = vld [vmem:[%s0] sm:$0xff]
    %28 = vset.pattern.permute.xlu0 0
    %29 = vperm.xlu0 %28, %v26
    %v30 = vpop.permute.xlu0 %29
    %v32 = vmul.f32 %v24, %v30
    %v33 = vmul.f32 %v25, %v30
    %34 = vst [vmem:[#allocation5] sm:$0xff] %v32
    %35 = vst [vmem:[#allocation5 + $0x8] sm:$0xff] %v33
    // Predicated region
    $region14: #{tpu_custom_call.1} parent=1 // pred_check
      _
    $region15: #{tpu_custom_call.1} parent=1 // pred_check_branch
      %37 = sbr.rel (0) target = $region17
    $region16: #{tpu_custom_call.1} parent=1 // pred_region
      %s39 = ssub.s32 256, 256
      %40 = vsyncadd [#allocation4], %s39
      %s42 = sshll.u32 [#allocation5], 4
      %s43 = int_to_ptr.vmem [resolvable:$true] %s42
      %45 = dma.vmem_to_hbm [thread:$0]  %s43, 256, %s2, [#allocation4]
    $region17: #{tpu_custom_call.1} parent=1 // pred_fallthru
      _
    // Predicated region
    $region18: #{tpu_custom_call.1} parent=1 // pred_check
      _
    $region19: #{tpu_custom_call.1} parent=1 // pred_check_branch
      %47 = sbr.rel (0) target = $region21
    $region20: #{tpu_custom_call.1} parent=1 // pred_region
      %48 = dma.done [#allocation4], 256
    $region21: #{tpu_custom_call.1} parent=1 // pred_fallthru
      _
    %49 = vsyncpa [#allocation3], 1
    %50 = vsyncpa [#allocation4], 1

</llo_original>
